<compile_context>
chip_gen: v5e
topology: v5e:2x2
jax: 0.10.0
libtpu: 0.0.40
codegen_flags: <defaults>
</compile_context>

<pallas_src>
import jax
import jax.numpy as jnp
from jax.experimental import pallas as pl
from jax.experimental.pallas import tpu as pltpu

# Sobel taps (same as the PyTorch module __init__), used by the reference.
#   Gx = [[1, 0, -1], [2, 0, -2], [1, 0, -1]],  Gy = Gx.T
_GX = ((1.0, 0.0, -1.0),
       (2.0, 0.0, -2.0),
       (1.0, 0.0, -1.0))
_GY = ((1.0, 2.0, 1.0),
       (0.0, 0.0, 0.0),
       (-1.0, -2.0, -1.0))


def _sobelxy_kernel(x_ref, o_ref, pad_ref):
    # x_ref  : (tb, H, W)        input tile (original dtype)
    # o_ref  : (tb, H, W)        output tile
    # pad_ref: (tb, H+2, W+2) f32 scratch holding the zero-padded tile
    _, H, W = x_ref.shape

    # Build the zero-padded tile in VMEM.  Re-zeroing every step keeps the
    # border correct even when the grid axis is sharded across TensorCores.
    pad_ref[...] = jnp.zeros_like(pad_ref)
    pad_ref[:, 1:H + 1, 1:W + 1] = x_ref[...].astype(jnp.float32)

    # Separable Sobel: Gx = [1,2,1]^T (x) [1,0,-1],  Gy = [1,0,-1]^T (x) [1,2,1]
    top = pad_ref[:, 0:H, :]        # x[i-1, :]   (W+2 wide)
    mid = pad_ref[:, 1:H + 1, :]    # x[i  , :]
    bot = pad_ref[:, 2:H + 2, :]    # x[i+1, :]
    sp = top + 2.0 * mid + bot      # vertical [1, 2, 1] pass
    dp = top - bot                  # vertical [1, 0, -1] pass

    gx = sp[:, :, 0:W] - sp[:, :, 2:W + 2]
    gy = dp[:, :, 0:W] + 2.0 * dp[:, :, 1:W + 1] + dp[:, :, 2:W + 2]

    o_ref[...] = (jnp.abs(gx) + jnp.abs(gy)).astype(o_ref.dtype)


def _largest_divisor_leq(n, cap):
    cap = max(1, min(n, cap))
    for d in range(cap, 0, -1):
        if n % d == 0:
            return d
    return 1


def sobelxy(x, *, block_bytes_target=1 << 20):
    """x: (N, C, H, W) float array -> (N, C, H, W), |Gx*x| + |Gy*x| depthwise."""
    N, C, H, W = x.shape
    B = N * C
    # Free reshape: every (n, c) plane is independent under the depthwise conv.
    xf = x.reshape(B, H, W)

    img_bytes = H * W * jnp.dtype(x.dtype).itemsize
    tb = _largest_divisor_leq(B, max(1, block_bytes_target // max(img_bytes, 1)))

    block_bytes = tb * img_bytes
    scratch_bytes = tb * (H + 2) * (W + 2) * 4
    # 2x double-buffered input + output blocks, persistent f32 pad scratch, slack.
    vmem_need = 4 * block_bytes + scratch_bytes + (2 << 20)
    # Cap at 48 MiB so the request stays inside v7x's 64 MiB physical VMEM;
    # floor at 16 MiB (v5e default scope) so small tiles never trip the limit.
    vmem_limit = int(min(max(vmem_need, 16 << 20), 48 << 20))

    out = pl.pallas_call(
        _sobelxy_kernel,
        out_shape=jax.ShapeDtypeStruct((B, H, W), x.dtype),
        grid_spec=pltpu.PrefetchScalarGridSpec(
            num_scalar_prefetch=0,
            grid=(B // tb,),
            in_specs=[pl.BlockSpec((tb, H, W), lambda b: (b, 0, 0))],
            out_specs=pl.BlockSpec((tb, H, W), lambda b: (b, 0, 0)),
            scratch_shapes=[pltpu.VMEM((tb, H + 2, W + 2), jnp.float32)],
        ),
        compiler_params=pltpu.CompilerParams(
            dimension_semantics=("parallel",),
            vmem_limit_bytes=vmem_limit),
    )(xf)
    return out.reshape(N, C, H, W)


def _reference(x):
    # Pure-JAX 9-tap reference for correctness sanity check.
    gx = jnp.array(_GX, dtype=jnp.float32)
    gy = jnp.array(_GY, dtype=jnp.float32)
    N, C, H, W = x.shape
    xp = jnp.pad(x.astype(jnp.float32), ((0, 0), (0, 0), (1, 1), (1, 1)))

    def conv(taps):
        acc = jnp.zeros((N, C, H, W), jnp.float32)
        for ky in range(3):
            for kx in range(3):
                acc = acc + taps[ky, kx] * xp[:, :, ky:ky + H, kx:kx + W]
        return acc

    return (jnp.abs(conv(gx)) + jnp.abs(conv(gy))).astype(x.dtype)


if __name__ == "__main__":
    key = jax.random.PRNGKey(0)
    x = jax.random.normal(key, (2, 4, 16, 16), dtype=jnp.float32)

    out = sobelxy(x)
    jax.block_until_ready(out)

    ref = _reference(x)
    assert out.shape == (2, 4, 16, 16), out.shape
    assert jnp.allclose(out, ref, atol=1e-5, rtol=1e-5), "mismatch vs reference"

    print("KERNEL_OK")
</pallas_src>

<mosaic_0001>
module attributes {stable_mosaic.version = 11 : i64} {
  func.func @_sobelxy_kernel(%arg0: i32, %arg1: memref<8x16x16xf32, #tpu.memory_space<vmem>>, %arg2: memref<8x16x16xf32, #tpu.memory_space<vmem>>, %arg3: memref<8x18x18xf32, #tpu.memory_space<vmem>>) attributes {dimension_semantics = [#tpu.dimension_semantics<parallel>], iteration_bounds = array<i64: 1>, scalar_prefetch = 0 : i64, scratch_operands = 1 : i64, tpu.core_type = #tpu.core_type<tc>, window_params = [{transform_indices = @transform_0, window_bounds = array<i64: 8, 16, 16>}, {transform_indices = @transform_1, window_bounds = array<i64: 8, 16, 16>}]} {
    %cst = arith.constant 0.000000e+00 : f32
    %0 = vector.broadcast %cst : f32 to vector<8x18x18xf32>
    %c0 = arith.constant 0 : index
    %c0_0 = arith.constant 0 : index
    %c0_1 = arith.constant 0 : index
    %1 = vector.load %arg3[%c0, %c0_0, %c0_1] : memref<8x18x18xf32, #tpu.memory_space<vmem>>, vector<8x18x18xf32>
    tpu.vector_store %arg3[%c0, %c0_0, %c0_1], %0 {strides = array<i32>} : memref<8x18x18xf32, #tpu.memory_space<vmem>>, vector<8x18x18xf32>,
    %c0_2 = arith.constant 0 : index
    %c0_3 = arith.constant 0 : index
    %c0_4 = arith.constant 0 : index
    %2 = vector.load %arg1[%c0_2, %c0_3, %c0_4] : memref<8x16x16xf32, #tpu.memory_space<vmem>>, vector<8x16x16xf32>
    %c0_5 = arith.constant 0 : index
    %c1 = arith.constant 1 : index
    %c1_6 = arith.constant 1 : index
    %3 = vector.load %arg3[%c0_5, %c1, %c1_6] : memref<8x18x18xf32, #tpu.memory_space<vmem>>, vector<8x16x16xf32>
    tpu.vector_store %arg3[%c0_5, %c1, %c1_6], %2 {strides = array<i32>} : memref<8x18x18xf32, #tpu.memory_space<vmem>>, vector<8x16x16xf32>,
    %c0_7 = arith.constant 0 : index
    %c0_8 = arith.constant 0 : index
    %c0_9 = arith.constant 0 : index
    %4 = vector.load %arg3[%c0_7, %c0_8, %c0_9] : memref<8x18x18xf32, #tpu.memory_space<vmem>>, vector<8x16x18xf32>
    %c0_10 = arith.constant 0 : index
    %c1_11 = arith.constant 1 : index
    %c0_12 = arith.constant 0 : index
    %5 = vector.load %arg3[%c0_10, %c1_11, %c0_12] : memref<8x18x18xf32, #tpu.memory_space<vmem>>, vector<8x16x18xf32>
    %c0_13 = arith.constant 0 : index
    %c2 = arith.constant 2 : index
    %c0_14 = arith.constant 0 : index
    %6 = vector.load %arg3[%c0_13, %c2, %c0_14] : memref<8x18x18xf32, #tpu.memory_space<vmem>>, vector<8x16x18xf32>
    %cst_15 = arith.constant 2.000000e+00 : f32
    %7 = vector.broadcast %cst_15 : f32 to vector<8x16x18xf32>
    %8 = arith.mulf %7, %5 : vector<8x16x18xf32>
    %9 = arith.addf %4, %8 : vector<8x16x18xf32>
    %10 = arith.addf %9, %6 : vector<8x16x18xf32>
    %11 = arith.subf %4, %6 : vector<8x16x18xf32>
    %12 = vector.extract_strided_slice %10 {offsets = [0, 0, 0], sizes = [8, 16, 16], strides = [1, 1, 1]} : vector<8x16x18xf32> to vector<8x16x16xf32>
    %13 = vector.extract_strided_slice %10 {offsets = [0, 0, 2], sizes = [8, 16, 16], strides = [1, 1, 1]} : vector<8x16x18xf32> to vector<8x16x16xf32>
    %14 = arith.subf %12, %13 : vector<8x16x16xf32>
    %15 = vector.extract_strided_slice %11 {offsets = [0, 0, 0], sizes = [8, 16, 16], strides = [1, 1, 1]} : vector<8x16x18xf32> to vector<8x16x16xf32>
    %16 = vector.extract_strided_slice %11 {offsets = [0, 0, 1], sizes = [8, 16, 16], strides = [1, 1, 1]} : vector<8x16x18xf32> to vector<8x16x16xf32>
    %cst_16 = arith.constant 2.000000e+00 : f32
    %17 = vector.broadcast %cst_16 : f32 to vector<8x16x16xf32>
    %18 = arith.mulf %17, %16 : vector<8x16x16xf32>
    %19 = arith.addf %15, %18 : vector<8x16x16xf32>
    %20 = vector.extract_strided_slice %11 {offsets = [0, 0, 2], sizes = [8, 16, 16], strides = [1, 1, 1]} : vector<8x16x18xf32> to vector<8x16x16xf32>
    %21 = arith.addf %19, %20 : vector<8x16x16xf32>
    %22 = math.absf %14 : vector<8x16x16xf32>
    %23 = math.absf %21 : vector<8x16x16xf32>
    %24 = arith.addf %22, %23 : vector<8x16x16xf32>
    %c0_17 = arith.constant 0 : index
    %c0_18 = arith.constant 0 : index
    %c0_19 = arith.constant 0 : index
    %25 = vector.load %arg2[%c0_17, %c0_18, %c0_19] : memref<8x16x16xf32, #tpu.memory_space<vmem>>, vector<8x16x16xf32>
    tpu.vector_store %arg2[%c0_17, %c0_18, %c0_19], %24 {strides = array<i32>} : memref<8x16x16xf32, #tpu.memory_space<vmem>>, vector<8x16x16xf32>,
    return
  }
  func.func @transform_0(%arg0: i32) -> (i32, i32, i32) {
    %c0_i32 = arith.constant 0 : i32
    %c0_i32_0 = arith.constant 0 : i32
    %c0_i32_1 = arith.constant 0 : i32
    return %arg0, %c0_i32, %c0_i32_0 : i32, i32, i32
  }
  func.func @transform_1(%arg0: i32) -> (i32, i32, i32) {
    %c0_i32 = arith.constant 0 : i32
    %c0_i32_0 = arith.constant 0 : i32
    %c0_i32_1 = arith.constant 0 : i32
    return %arg0, %c0_i32, %c0_i32_0 : i32, i32, i32
  }
}

</mosaic_0001>

<llo_original>
// kernel: tpu_custom_call.1
$region0: #{tpu_custom_call.1}
  #allocation0 [shape = 'u32[]', space=smem, size = 0x4, offset = 0x4, fixed_abs, tag = 'smem constant byte address 0x4 - core index']
  #allocation1 [shape = 'u32[72,128]{1,0:T(1,128)}', space=vmem, size = 0x9000, scoped, tag = 'internal scratch']
  #allocation2 [shape = 'f32[8,18,18]{2,1,0:T(8,128)}', space=vmem, size = 0x18000, scoped, tag = 'scratch operand']
  %s0 = inlined_call_operand.hbm [shape: f32[8,16,16], index: 0, kind: input, shape index: {}]
  %s1 = inlined_call_operand.hbm [shape: f32[8,16,16], index: 1, kind: output, shape index: {}]
  %s2 = sld [smem:[#allocation0]]
  $region18: #{tpu_custom_call.1} parent=0
    _
  %s4 = ssub.s32 1, %s2
  %s5 = scalar_select 0, %s4, %s2
  $region1: #{tpu_custom_call.1} parent=0
    #allocation3 [shape = 'u8[65536]{0}', space=vmem, size = 0x10000, scoped, tag = 'input window, operand 0, single buffered']
    #allocation4 [shape = 's32[1]{0}', space=sflag, size = 0x4, scoped, tag = 'scoped memory for tpu_custom_call.1']
    #allocation5 [shape = 's32[1]{0}', space=sflag, size = 0x4, scoped, tag = 'scoped memory for tpu_custom_call.1']
    #allocation6 [shape = 'u8[65536]{0}', space=vmem, size = 0x10000, scoped, tag = 'output window, operand 0, single buffered']
    %6 = vsyncpa [#allocation4], 0
    %7 = vsyncpa [#allocation5], 0
    // Predicated region
    $region2: #{tpu_custom_call.1} parent=1 // pred_check
      _
    $region3: #{tpu_custom_call.1} parent=1 // pred_check_branch
      %9 = sbr.rel (0) target = $region5
    $region4: #{tpu_custom_call.1} parent=1 // pred_region
      %11 = vsyncadd [#allocation4], 0
      %s12 = sshll.u32 %s0, 4
      %s13 = int_to_ptr.hbm [resolvable:$true] %s12
      %s14 = sshll.u32 [#allocation3], 4
      %s15 = int_to_ptr.vmem [resolvable:$true] %s14
      %20 = dma.hbm_to_vmem [thread:$0]  %s13, 2048, %s15, [#allocation4], 128, 128, 8
    $region5: #{tpu_custom_call.1} parent=1 // pred_fallthru
      _
    // Predicated region
    $region6: #{tpu_custom_call.1} parent=1 // pred_check
      _
    $region7: #{tpu_custom_call.1} parent=1 // pred_check_branch
      %22 = sbr.rel (0) target = $region9
    $region8: #{tpu_custom_call.1} parent=1 // pred_region
      %24 = dma.done [#allocation4], 2048
    $region9: #{tpu_custom_call.1} parent=1 // pred_fallthru
      _
    %vm25 = vcmask 146432
    %26 = vst.msk [vmem:[#allocation2] sm:$0xff] %vm25, 0.0
    %27 = vst.msk [vmem:[#allocation2 + $0x8] sm:$0xff] %vm25, 0.0
    %vm28 = vcmask 140288
    %29 = vst.msk [vmem:[#allocation2 + $0x10] sm:$0x3] %vm28, 0.0
    %30 = vst.msk [vmem:[#allocation2 + $0x18] sm:$0xff] %vm25, 0.0
    %31 = vst.msk [vmem:[#allocation2 + $0x20] sm:$0xff] %vm25, 0.0
    %32 = vst.msk [vmem:[#allocation2 + $0x28] sm:$0x3] %vm28, 0.0
    %33 = vst.msk [vmem:[#allocation2 + $0x30] sm:$0xff] %vm25, 0.0
    %34 = vst.msk [vmem:[#allocation2 + $0x38] sm:$0xff] %vm25, 0.0
    %35 = vst.msk [vmem:[#allocation2 + $0x40] sm:$0x3] %vm28, 0.0
    %36 = vst.msk [vmem:[#allocation2 + $0x48] sm:$0xff] %vm25, 0.0
    %37 = vst.msk [vmem:[#allocation2 + $0x50] sm:$0xff] %vm25, 0.0
    %38 = vst.msk [vmem:[#allocation2 + $0x58] sm:$0x3] %vm28, 0.0
    %39 = vst.msk [vmem:[#allocation2 + $0x60] sm:$0xff] %vm25, 0.0
    %40 = vst.msk [vmem:[#allocation2 + $0x68] sm:$0xff] %vm25, 0.0
    %41 = vst.msk [vmem:[#allocation2 + $0x70] sm:$0x3] %vm28, 0.0
    %42 = vst.msk [vmem:[#allocation2 + $0x78] sm:$0xff] %vm25, 0.0
    %43 = vst.msk [vmem:[#allocation2 + $0x80] sm:$0xff] %vm25, 0.0
    %44 = vst.msk [vmem:[#allocation2 + $0x88] sm:$0x3] %vm28, 0.0
    %45 = vst.msk [vmem:[#allocation2 + $0x90] sm:$0xff] %vm25, 0.0
    %46 = vst.msk [vmem:[#allocation2 + $0x98] sm:$0xff] %vm25, 0.0
    %47 = vst.msk [vmem:[#allocation2 + $0xa0] sm:$0x3] %vm28, 0.0
    %48 = vst.msk [vmem:[#allocation2 + $0xa8] sm:$0xff] %vm25, 0.0
    %49 = vst.msk [vmem:[#allocation2 + $0xb0] sm:$0xff] %vm25, 0.0
    %50 = vst.msk [vmem:[#allocation2 + $0xb8] sm:$0x3] %vm28, 0.0
    %v51 = vld [vmem:[#allocation3] sm:$0xff]
    %v52 = vld [vmem:[#allocation3 + $0x8] sm:$0xff]
    %v53 = vld [vmem:[#allocation3 + $0x10] sm:$0xff]
    %v54 = vld [vmem:[#allocation3 + $0x18] sm:$0xff]
    %v55 = vld [vmem:[#allocation3 + $0x20] sm:$0xff]
    %v56 = vld [vmem:[#allocation3 + $0x28] sm:$0xff]
    %v57 = vld [vmem:[#allocation3 + $0x30] sm:$0xff]
    %v58 = vld [vmem:[#allocation3 + $0x38] sm:$0xff]
    %v59 = vld [vmem:[#allocation3 + $0x40] sm:$0xff]
    %v60 = vld [vmem:[#allocation3 + $0x48] sm:$0xff]
    %v61 = vld [vmem:[#allocation3 + $0x50] sm:$0xff]
    %v62 = vld [vmem:[#allocation3 + $0x58] sm:$0xff]
    %v63 = vld [vmem:[#allocation3 + $0x60] sm:$0xff]
    %v64 = vld [vmem:[#allocation3 + $0x68] sm:$0xff]
    %v65 = vld [vmem:[#allocation3 + $0x70] sm:$0xff]
    %v66 = vld [vmem:[#allocation3 + $0x78] sm:$0xff]
    %83 = vrot.lane.b32.xlu0 %v51, 1
    %v84 = vpop.permute.xlu0 %83
    %85 = vrot.lane.b32.xlu0 %v52, 1
    %v86 = vpop.permute.xlu0 %85
    %87 = vrot.lane.b32.xlu0 %v53, 1
    %v88 = vpop.permute.xlu0 %87
    %89 = vrot.lane.b32.xlu0 %v54, 1
    %v90 = vpop.permute.xlu0 %89
    %91 = vrot.lane.b32.xlu0 %v55, 1
    %v92 = vpop.permute.xlu0 %91
    %93 = vrot.lane.b32.xlu0 %v56, 1
    %v94 = vpop.permute.xlu0 %93
    %95 = vrot.lane.b32.xlu0 %v57, 1
    %v96 = vpop.permute.xlu0 %95
    %97 = vrot.lane.b32.xlu0 %v58, 1
    %v98 = vpop.permute.xlu0 %97
    %99 = vrot.lane.b32.xlu0 %v59, 1
    %v100 = vpop.permute.xlu0 %99
    %101 = vrot.lane.b32.xlu0 %v60, 1
    %v102 = vpop.permute.xlu0 %101
    %103 = vrot.lane.b32.xlu0 %v61, 1
    %v104 = vpop.permute.xlu0 %103
    %105 = vrot.lane.b32.xlu0 %v62, 1
    %v106 = vpop.permute.xlu0 %105
    %107 = vrot.lane.b32.xlu0 %v63, 1
    %v108 = vpop.permute.xlu0 %107
    %109 = vrot.lane.b32.xlu0 %v64, 1
    %v110 = vpop.permute.xlu0 %109
    %111 = vrot.lane.b32.xlu0 %v65, 1
    %v112 = vpop.permute.xlu0 %111
    %113 = vrot.lane.b32.xlu0 %v66, 1
    %v114 = vpop.permute.xlu0 %113
    %vm131 = vcmask 138248
    %132 = vst.msk [vmem:[#allocation2 + $0x1] sm:$0xff] %vm131, %v84
    %133 = vst.msk [vmem:[#allocation2 + $0x9] sm:$0xff] %vm131, %v86
    %134 = vst.msk [vmem:[#allocation2 + $0x19] sm:$0xff] %vm131, %v88
    %135 = vst.msk [vmem:[#allocation2 + $0x21] sm:$0xff] %vm131, %v90
    %136 = vst.msk [vmem:[#allocation2 + $0x31] sm:$0xff] %vm131, %v92
    %137 = vst.msk [vmem:[#allocation2 + $0x39] sm:$0xff] %vm131, %v94
    %138 = vst.msk [vmem:[#allocation2 + $0x49] sm:$0xff] %vm131, %v96
    %139 = vst.msk [vmem:[#allocation2 + $0x51] sm:$0xff] %vm131, %v98
    %140 = vst.msk [vmem:[#allocation2 + $0x61] sm:$0xff] %vm131, %v100
    %141 = vst.msk [vmem:[#allocation2 + $0x69] sm:$0xff] %vm131, %v102
    %142 = vst.msk [vmem:[#allocation2 + $0x79] sm:$0xff] %vm131, %v104
    %143 = vst.msk [vmem:[#allocation2 + $0x81] sm:$0xff] %vm131, %v106
    %144 = vst.msk [vmem:[#allocation2 + $0x91] sm:$0xff] %vm131, %v108
    %145 = vst.msk [vmem:[#allocation2 + $0x99] sm:$0xff] %vm131, %v110
    %146 = vst.msk [vmem:[#allocation2 + $0xa9] sm:$0xff] %vm131, %v112
    %147 = vst.msk [vmem:[#allocation2 + $0xb1] sm:$0xff] %vm131, %v114
    %v148 = vld [vmem:[#allocation2] sm:$0xff]
    %v149 = vld [vmem:[#allocation2 + $0x8] sm:$0xff]
    %v150 = vld [vmem:[#allocation2 + $0x18] sm:$0xff]
    %v151 = vld [vmem:[#allocation2 + $0x20] sm:$0xff]
    %v152 = vld [vmem:[#allocation2 + $0x30] sm:$0xff]
    %v153 = vld [vmem:[#allocation2 + $0x38] sm:$0xff]
    %v154 = vld [vmem:[#allocation2 + $0x48] sm:$0xff]
    %v155 = vld [vmem:[#allocation2 + $0x50] sm:$0xff]
    %v156 = vld [vmem:[#allocation2 + $0x60] sm:$0xff]
    %v157 = vld [vmem:[#allocation2 + $0x68] sm:$0xff]
    %v158 = vld [vmem:[#allocation2 + $0x78] sm:$0xff]
    %v159 = vld [vmem:[#allocation2 + $0x80] sm:$0xff]
    %v160 = vld [vmem:[#allocation2 + $0x90] sm:$0xff]
    %v161 = vld [vmem:[#allocation2 + $0x98] sm:$0xff]
    %v162 = vld [vmem:[#allocation2 + $0xa8] sm:$0xff]
    %v163 = vld [vmem:[#allocation2 + $0xb0] sm:$0xff]
    %v164 = vld [vmem:[#allocation2 + $0x1] sm:$0xff]
    %v165 = vld [vmem:[#allocation2 + $0x9] sm:$0xff]
    %v166 = vld [vmem:[#allocation2 + $0x19] sm:$0xff]
    %v167 = vld [vmem:[#allocation2 + $0x21] sm:$0xff]
    %v168 = vld [vmem:[#allocation2 + $0x31] sm:$0xff]
    %v169 = vld [vmem:[#allocation2 + $0x39] sm:$0xff]
    %v170 = vld [vmem:[#allocation2 + $0x49] sm:$0xff]
    %v171 = vld [vmem:[#allocation2 + $0x51] sm:$0xff]
    %v172 = vld [vmem:[#allocation2 + $0x61] sm:$0xff]
    %v173 = vld [vmem:[#allocation2 + $0x69] sm:$0xff]
    %v174 = vld [vmem:[#allocation2 + $0x79] sm:$0xff]
    %v175 = vld [vmem:[#allocation2 + $0x81] sm:$0xff]
    %v176 = vld [vmem:[#allocation2 + $0x91] sm:$0xff]
    %v177 = vld [vmem:[#allocation2 + $0x99] sm:$0xff]
    %v178 = vld [vmem:[#allocation2 + $0xa9] sm:$0xff]
    %v179 = vld [vmem:[#allocation2 + $0xb1] sm:$0xff]
    %v180 = vld [vmem:[#allocation2 + $0x2] sm:$0xff]
    %v181 = vld [vmem:[#allocation2 + $0xa] sm:$0xff]
    %v182 = vld [vmem:[#allocation2 + $0x1a] sm:$0xff]
    %v183 = vld [vmem:[#allocation2 + $0x22] sm:$0xff]
    %v184 = vld [vmem:[#allocation2 + $0x32] sm:$0xff]
    %v185 = vld [vmem:[#allocation2 + $0x3a] sm:$0xff]
    %v186 = vld [vmem:[#allocation2 + $0x4a] sm:$0xff]
    %v187 = vld [vmem:[#allocation2 + $0x52] sm:$0xff]
    %v188 = vld [vmem:[#allocation2 + $0x62] sm:$0xff]
    %v189 = vld [vmem:[#allocation2 + $0x6a] sm:$0xff]
    %v190 = vld [vmem:[#allocation2 + $0x7a] sm:$0xff]
    %v191 = vld [vmem:[#allocation2 + $0x82] sm:$0xff]
    %v192 = vld [vmem:[#allocation2 + $0x92] sm:$0xff]
    %v193 = vld [vmem:[#allocation2 + $0x9a] sm:$0xff]
    %v194 = vld [vmem:[#allocation2 + $0xaa] sm:$0xff]
    %v195 = vld [vmem:[#allocation2 + $0xb2] sm:$0xff]
    %v196 = vmul.f32 %v164, 2.0
    %v197 = vmul.f32 %v165, 2.0
    %v198 = vmul.f32 %v166, 2.0
    %v199 = vmul.f32 %v167, 2.0
    %v200 = vmul.f32 %v168, 2.0
    %v201 = vmul.f32 %v169, 2.0
    %v202 = vmul.f32 %v170, 2.0
    %v203 = vmul.f32 %v171, 2.0
    %v204 = vmul.f32 %v172, 2.0
    %v205 = vmul.f32 %v173, 2.0
    %v206 = vmul.f32 %v174, 2.0
    %v207 = vmul.f32 %v175, 2.0
    %v208 = vmul.f32 %v176, 2.0
    %v209 = vmul.f32 %v177, 2.0
    %v210 = vmul.f32 %v178, 2.0
    %v211 = vmul.f32 %v179, 2.0
    %v212 = vadd.f32 %v148, %v196
    %v213 = vadd.f32 %v149, %v197
    %v214 = vadd.f32 %v150, %v198
    %v215 = vadd.f32 %v151, %v199
    %v216 = vadd.f32 %v152, %v200
    %v217 = vadd.f32 %v153, %v201
    %v218 = vadd.f32 %v154, %v202
    %v219 = vadd.f32 %v155, %v203
    %v220 = vadd.f32 %v156, %v204
    %v221 = vadd.f32 %v157, %v205
    %v222 = vadd.f32 %v158, %v206
    %v223 = vadd.f32 %v159, %v207
    %v224 = vadd.f32 %v160, %v208
    %v225 = vadd.f32 %v161, %v209
    %v226 = vadd.f32 %v162, %v210
    %v227 = vadd.f32 %v163, %v211
    %v228 = vadd.f32 %v212, %v180
    %v229 = vadd.f32 %v213, %v181
    %v230 = vadd.f32 %v214, %v182
    %v231 = vadd.f32 %v215, %v183
    %v232 = vadd.f32 %v216, %v184
    %v233 = vadd.f32 %v217, %v185
    %v234 = vadd.f32 %v218, %v186
    %v235 = vadd.f32 %v219, %v187
    %v236 = vadd.f32 %v220, %v188
    %v237 = vadd.f32 %v221, %v189
    %v238 = vadd.f32 %v222, %v190
    %v239 = vadd.f32 %v223, %v191
    %v240 = vadd.f32 %v224, %v192
    %v241 = vadd.f32 %v225, %v193
    %v242 = vadd.f32 %v226, %v194
    %v243 = vadd.f32 %v227, %v195
    %v244 = vsub.f32 %v148, %v180
    %v245 = vsub.f32 %v149, %v181
    %v246 = vsub.f32 %v150, %v182
    %v247 = vsub.f32 %v151, %v183
    %v248 = vsub.f32 %v152, %v184
    %v249 = vsub.f32 %v153, %v185
    %v250 = vsub.f32 %v154, %v186
    %v251 = vsub.f32 %v155, %v187
    %v252 = vsub.f32 %v156, %v188
    %v253 = vsub.f32 %v157, %v189
    %v254 = vsub.f32 %v158, %v190
    %v255 = vsub.f32 %v159, %v191
    %v256 = vsub.f32 %v160, %v192
    %v257 = vsub.f32 %v161, %v193
    %v258 = vsub.f32 %v162, %v194
    %v259 = vsub.f32 %v163, %v195
    %276 = vrot.lane.b32.xlu0 %v228, 126
    %v277 = vpop.permute.xlu0 %276
    %278 = vrot.lane.b32.xlu0 %v229, 126
    %v279 = vpop.permute.xlu0 %278
    %280 = vrot.lane.b32.xlu0 %v230, 126
    %v281 = vpop.permute.xlu0 %280
    %282 = vrot.lane.b32.xlu0 %v231, 126
    %v283 = vpop.permute.xlu0 %282
    %284 = vrot.lane.b32.xlu0 %v232, 126
    %v285 = vpop.permute.xlu0 %284
    %286 = vrot.lane.b32.xlu0 %v233, 126
    %v287 = vpop.permute.xlu0 %286
    %288 = vrot.lane.b32.xlu0 %v234, 126
    %v289 = vpop.permute.xlu0 %288
    %290 = vrot.lane.b32.xlu0 %v235, 126
    %v291 = vpop.permute.xlu0 %290
    %292 = vrot.lane.b32.xlu0 %v236, 126
    %v293 = vpop.permute.xlu0 %292
    %294 = vrot.lane.b32.xlu0 %v237, 126
    %v295 = vpop.permute.xlu0 %294
    %296 = vrot.lane.b32.xlu0 %v238, 126
    %v297 = vpop.permute.xlu0 %296
    %298 = vrot.lane.b32.xlu0 %v239, 126
    %v299 = vpop.permute.xlu0 %298
    %300 = vrot.lane.b32.xlu0 %v240, 126
    %v301 = vpop.permute.xlu0 %300
    %302 = vrot.lane.b32.xlu0 %v241, 126
    %v303 = vpop.permute.xlu0 %302
    %304 = vrot.lane.b32.xlu0 %v242, 126
    %v305 = vpop.permute.xlu0 %304
    %306 = vrot.lane.b32.xlu0 %v243, 126
    %v307 = vpop.permute.xlu0 %306
    %v324 = vsub.f32 %v228, %v277
    %v325 = vsub.f32 %v229, %v279
    %v326 = vsub.f32 %v230, %v281
    %v327 = vsub.f32 %v231, %v283
    %v328 = vsub.f32 %v232, %v285
    %v329 = vsub.f32 %v233, %v287
    %v330 = vsub.f32 %v234, %v289
    %v331 = vsub.f32 %v235, %v291
    %v332 = vsub.f32 %v236, %v293
    %v333 = vsub.f32 %v237, %v295
    %v334 = vsub.f32 %v238, %v297
    %v335 = vsub.f32 %v239, %v299
    %v336 = vsub.f32 %v240, %v301
    %v337 = vsub.f32 %v241, %v303
    %v338 = vsub.f32 %v242, %v305
    %v339 = vsub.f32 %v243, %v307
    %v340 = vmul.f32 %v244, 2.0
    %v341 = vmul.f32 %v245, 2.0
    %v342 = vmul.f32 %v246, 2.0
    %v343 = vmul.f32 %v247, 2.0
    %v344 = vmul.f32 %v248, 2.0
    %v345 = vmul.f32 %v249, 2.0
    %v346 = vmul.f32 %v250, 2.0
    %v347 = vmul.f32 %v251, 2.0
    %v348 = vmul.f32 %v252, 2.0
    %v349 = vmul.f32 %v253, 2.0
    %v350 = vmul.f32 %v254, 2.0
    %v351 = vmul.f32 %v255, 2.0
    %v352 = vmul.f32 %v256, 2.0
    %v353 = vmul.f32 %v257, 2.0
    %v354 = vmul.f32 %v258, 2.0
    %v355 = vmul.f32 %v259, 2.0
    %372 = vrot.lane.b32.xlu0 %v340, 127
    %v373 = vpop.permute.xlu0 %372
    %374 = vrot.lane.b32.xlu0 %v341, 127
    %v375 = vpop.permute.xlu0 %374
    %376 = vrot.lane.b32.xlu0 %v342, 127
    %v377 = vpop.permute.xlu0 %376
    %378 = vrot.lane.b32.xlu0 %v343, 127
    %v379 = vpop.permute.xlu0 %378
    %380 = vrot.lane.b32.xlu0 %v344, 127
    %v381 = vpop.permute.xlu0 %380
    %382 = vrot.lane.b32.xlu0 %v345, 127
    %v383 = vpop.permute.xlu0 %382
    %384 = vrot.lane.b32.xlu0 %v346, 127
    %v385 = vpop.permute.xlu0 %384
    %386 = vrot.lane.b32.xlu0 %v347, 127
    %v387 = vpop.permute.xlu0 %386
    %388 = vrot.lane.b32.xlu0 %v348, 127
    %v389 = vpop.permute.xlu0 %388
    %390 = vrot.lane.b32.xlu0 %v349, 127
    %v391 = vpop.permute.xlu0 %390
    %392 = vrot.lane.b32.xlu0 %v350, 127
    %v393 = vpop.permute.xlu0 %392
    %394 = vrot.lane.b32.xlu0 %v351, 127
    %v395 = vpop.permute.xlu0 %394
    %396 = vrot.lane.b32.xlu0 %v352, 127
    %v397 = vpop.permute.xlu0 %396
    %398 = vrot.lane.b32.xlu0 %v353, 127
    %v399 = vpop.permute.xlu0 %398
    %400 = vrot.lane.b32.xlu0 %v354, 127
    %v401 = vpop.permute.xlu0 %400
    %402 = vrot.lane.b32.xlu0 %v355, 127
    %v403 = vpop.permute.xlu0 %402
    %v420 = vadd.f32 %v244, %v373
    %v421 = vadd.f32 %v245, %v375
    %v422 = vadd.f32 %v246, %v377
    %v423 = vadd.f32 %v247, %v379
    %v424 = vadd.f32 %v248, %v381
    %v425 = vadd.f32 %v249, %v383
    %v426 = vadd.f32 %v250, %v385
    %v427 = vadd.f32 %v251, %v387
    %v428 = vadd.f32 %v252, %v389
    %v429 = vadd.f32 %v253, %v391
    %v430 = vadd.f32 %v254, %v393
    %v431 = vadd.f32 %v255, %v395
    %v432 = vadd.f32 %v256, %v397
    %v433 = vadd.f32 %v257, %v399
    %v434 = vadd.f32 %v258, %v401
    %v435 = vadd.f32 %v259, %v403
    %452 = vrot.lane.b32.xlu0 %v244, 126
    %v453 = vpop.permute.xlu0 %452
    %454 = vrot.lane.b32.xlu0 %v245, 126
    %v455 = vpop.permute.xlu0 %454
    %456 = vrot.lane.b32.xlu0 %v246, 126
    %v457 = vpop.permute.xlu0 %456
    %458 = vrot.lane.b32.xlu0 %v247, 126
    %v459 = vpop.permute.xlu0 %458
    %460 = vrot.lane.b32.xlu0 %v248, 126
    %v461 = vpop.permute.xlu0 %460
    %462 = vrot.lane.b32.xlu0 %v249, 126
    %v463 = vpop.permute.xlu0 %462
    %464 = vrot.lane.b32.xlu0 %v250, 126
    %v465 = vpop.permute.xlu0 %464
    %466 = vrot.lane.b32.xlu0 %v251, 126
    %v467 = vpop.permute.xlu0 %466
    %468 = vrot.lane.b32.xlu0 %v252, 126
    %v469 = vpop.permute.xlu0 %468
    %470 = vrot.lane.b32.xlu0 %v253, 126
    %v471 = vpop.permute.xlu0 %470
    %472 = vrot.lane.b32.xlu0 %v254, 126
    %v473 = vpop.permute.xlu0 %472
    %474 = vrot.lane.b32.xlu0 %v255, 126
    %v475 = vpop.permute.xlu0 %474
    %476 = vrot.lane.b32.xlu0 %v256, 126
    %v477 = vpop.permute.xlu0 %476
    %478 = vrot.lane.b32.xlu0 %v257, 126
    %v479 = vpop.permute.xlu0 %478
    %480 = vrot.lane.b32.xlu0 %v258, 126
    %v481 = vpop.permute.xlu0 %480
    %482 = vrot.lane.b32.xlu0 %v259, 126
    %v483 = vpop.permute.xlu0 %482
    %v500 = vadd.f32 %v420, %v453
    %v501 = vadd.f32 %v421, %v455
    %v502 = vadd.f32 %v422, %v457
    %v503 = vadd.f32 %v423, %v459
    %v504 = vadd.f32 %v424, %v461
    %v505 = vadd.f32 %v425, %v463
    %v506 = vadd.f32 %v426, %v465
    %v507 = vadd.f32 %v427, %v467
    %v508 = vadd.f32 %v428, %v469
    %v509 = vadd.f32 %v429, %v471
    %v510 = vadd.f32 %v430, %v473
    %v511 = vadd.f32 %v431, %v475
    %v512 = vadd.f32 %v432, %v477
    %v513 = vadd.f32 %v433, %v479
    %v514 = vadd.f32 %v434, %v481
    %v515 = vadd.f32 %v435, %v483
    %v516 = vand.u32 2147483647, %v324
    %v517 = vand.u32 2147483647, %v325
    %v518 = vand.u32 2147483647, %v326
    %v519 = vand.u32 2147483647, %v327
    %v520 = vand.u32 2147483647, %v328
    %v521 = vand.u32 2147483647, %v329
    %v522 = vand.u32 2147483647, %v330
    %v523 = vand.u32 2147483647, %v331
    %v524 = vand.u32 2147483647, %v332
    %v525 = vand.u32 2147483647, %v333
    %v526 = vand.u32 2147483647, %v334
    %v527 = vand.u32 2147483647, %v335
    %v528 = vand.u32 2147483647, %v336
    %v529 = vand.u32 2147483647, %v337
    %v530 = vand.u32 2147483647, %v338
    %v531 = vand.u32 2147483647, %v339
    %v532 = vand.u32 2147483647, %v500
    %v533 = vand.u32 2147483647, %v501
    %v534 = vand.u32 2147483647, %v502
    %v535 = vand.u32 2147483647, %v503
    %v536 = vand.u32 2147483647, %v504
    %v537 = vand.u32 2147483647, %v505
    %v538 = vand.u32 2147483647, %v506
    %v539 = vand.u32 2147483647, %v507
    %v540 = vand.u32 2147483647, %v508
    %v541 = vand.u32 2147483647, %v509
    %v542 = vand.u32 2147483647, %v510
    %v543 = vand.u32 2147483647, %v511
    %v544 = vand.u32 2147483647, %v512
    %v545 = vand.u32 2147483647, %v513
    %v546 = vand.u32 2147483647, %v514
    %v547 = vand.u32 2147483647, %v515
    %v548 = vadd.f32 %v516, %v532
    %v549 = vadd.f32 %v517, %v533
    %v550 = vadd.f32 %v518, %v534
    %v551 = vadd.f32 %v519, %v535
    %v552 = vadd.f32 %v520, %v536
    %v553 = vadd.f32 %v521, %v537
    %v554 = vadd.f32 %v522, %v538
    %v555 = vadd.f32 %v523, %v539
    %v556 = vadd.f32 %v524, %v540
    %v557 = vadd.f32 %v525, %v541
    %v558 = vadd.f32 %v526, %v542
    %v559 = vadd.f32 %v527, %v543
    %v560 = vadd.f32 %v528, %v544
    %v561 = vadd.f32 %v529, %v545
    %v562 = vadd.f32 %v530, %v546
    %v563 = vadd.f32 %v531, %v547
    %vm564 = vcmask 130048
    %565 = vst.msk [vmem:[#allocation6] sm:$0xff] %vm564, %v548
    %566 = vst.msk [vmem:[#allocation6 + $0x8] sm:$0xff] %vm564, %v549
    %567 = vst.msk [vmem:[#allocation6 + $0x10] sm:$0xff] %vm564, %v550
    %568 = vst.msk [vmem:[#allocation6 + $0x18] sm:$0xff] %vm564, %v551
    %569 = vst.msk [vmem:[#allocation6 + $0x20] sm:$0xff] %vm564, %v552
    %570 = vst.msk [vmem:[#allocation6 + $0x28] sm:$0xff] %vm564, %v553
    %571 = vst.msk [vmem:[#allocation6 + $0x30] sm:$0xff] %vm564, %v554
    %572 = vst.msk [vmem:[#allocation6 + $0x38] sm:$0xff] %vm564, %v555
    %573 = vst.msk [vmem:[#allocation6 + $0x40] sm:$0xff] %vm564, %v556
    %574 = vst.msk [vmem:[#allocation6 + $0x48] sm:$0xff] %vm564, %v557
    %575 = vst.msk [vmem:[#allocation6 + $0x50] sm:$0xff] %vm564, %v558
    %576 = vst.msk [vmem:[#allocation6 + $0x58] sm:$0xff] %vm564, %v559
    %577 = vst.msk [vmem:[#allocation6 + $0x60] sm:$0xff] %vm564, %v560
    %578 = vst.msk [vmem:[#allocation6 + $0x68] sm:$0xff] %vm564, %v561
    %579 = vst.msk [vmem:[#allocation6 + $0x70] sm:$0xff] %vm564, %v562
    %580 = vst.msk [vmem:[#allocation6 + $0x78] sm:$0xff] %vm564, %v563
    // Predicated region
    $region10: #{tpu_custom_call.1} parent=1 // pred_check
      _
    $region11: #{tpu_custom_call.1} parent=1 // pred_check_branch
      %582 = sbr.rel (0) target = $region13
    $region12: #{tpu_custom_call.1} parent=1 // pred_region
      %584 = vsyncadd [#allocation5], 0
      %s585 = sshll.u32 [#allocation6], 4
      %s586 = int_to_ptr.vmem [resolvable:$true] %s585
      %s587 = sshll.u32 %s1, 4
      %s588 = int_to_ptr.hbm [resolvable:$true] %s587
      %593 = dma.vmem_to_hbm [thread:$0]  %s586, 2048, %s588, [#allocation5], 128, 128, 8
    $region13: #{tpu_custom_call.1} parent=1 // pred_fallthru
      _
    // Predicated region
    $region14: #{tpu_custom_call.1} parent=1 // pred_check
      _
    $region15: #{tpu_custom_call.1} parent=1 // pred_check_branch
      %595 = sbr.rel (0) target = $region17
    $region16: #{tpu_custom_call.1} parent=1 // pred_region
      %597 = dma.done [#allocation5], 2048
    $region17: #{tpu_custom_call.1} parent=1 // pred_fallthru
      _
    %598 = vsyncpa [#allocation4], 1
    %599 = vsyncpa [#allocation5], 1

</llo_original>
